<compile_context>
chip_gen: v6e
topology: v6e:2x2x1
jax: 0.10.0
libtpu: 0.0.40
codegen_flags: <defaults>
</compile_context>

<pallas_src>
import jax
import jax.numpy as jnp
from jax.experimental import pallas as pl
from jax.experimental.pallas import tpu as pltpu


HIDDEN = 256


def _critic_kernel(sa_ref, w1_ref, w25_ref, w36_ref, bias_ref, out_ref):
    H = HIDDEN
    bias = bias_ref[...]                 # (3, 2H) float32
    b1 = bias[0:1, :]                    # (1, 2H)  layer-1 bias [b1 | b4]
    b2h = bias[1:2, :H]                  # (1, H)   layer-2 bias, head 1
    b2g = bias[1:2, H:]                  # (1, H)   layer-2 bias, head 2
    b3 = bias[2:3, :2]                   # (1, 2)   [b3, b6]

    sa = sa_ref[...].astype(jnp.bfloat16)   # no-op: wrapper already passes bf16

    # --- layer 1, both heads fused in ONE MXU pass: (tb, 2H) = [h1 | g1] ---
    hg1 = jnp.dot(sa, w1_ref[...], preferred_element_type=jnp.float32) + b1
    hg1 = jnp.maximum(hg1, 0.0)
    h1 = hg1[:, :H].astype(jnp.bfloat16)
    g1 = hg1[:, H:].astype(jnp.bfloat16)

    # --- layer 2: two native 256x256 MXU matmuls (one per head), f32 epilogue ---
    h2 = jnp.maximum(
        jnp.dot(h1, w25_ref[0], preferred_element_type=jnp.float32) + b2h, 0.0)
    g2 = jnp.maximum(
        jnp.dot(g1, w25_ref[1], preferred_element_type=jnp.float32) + b2g, 0.0)

    # --- layer 3, both heads fused in ONE MXU pass against a (2H, 2) weight ---
    # [h2 | g2] @ [[w3, 0], [0, w6]]  ->  lane-dense (tb, 2) output.
    hg2 = jnp.concatenate(
        [h2.astype(jnp.bfloat16), g2.astype(jnp.bfloat16)], axis=-1)   # (tb, 2H)
    out_ref[...] = (jnp.dot(hg2, w36_ref[...],
                            preferred_element_type=jnp.float32) + b3)


def _pick_batch_tile(B):
    # Small / eval batches: one tile, no padding, single grid step.
    if B <= 256:
        return B
    # Training scale: biggest tile in {1024, 512, 256} that still leaves >= 2
    # grid steps (both v7x TensorCores get work; single-TC v5e/v6e unaffected)
    # and amortizes the ~0.35us per-grid-step overhead.
    for tb in (1024, 512, 256):
        if B >= 2 * tb:
            return tb
    return 256


def critic_pallas(state, action, packed):
    """Twin-Q forward in one Pallas kernel.

    Returns the fused (B, 2) float32 output: column 0 = q1, column 1 = q2.
    """
    B, sd = state.shape
    ad = action.shape[1]
    H = HIDDEN

    # Same concat as the module's torch.cat, emitted as bf16 so the kernel's
    # input DMA bytes are halved and layer 1 is a single MXU pass.
    sa = jnp.concatenate(
        [state.astype(jnp.bfloat16), action.astype(jnp.bfloat16)], axis=-1)

    tb = _pick_batch_tile(B)
    Bp = pl.cdiv(B, tb) * tb
    if Bp != B:
        # Pad dead rows (zero state/action); their outputs are sliced off below.
        sa = jnp.pad(sa, ((0, Bp - B), (0, 0)))
    grid = (Bp // tb,)

    batch_map = lambda i: (i, 0)
    const2 = lambda i: (0, 0)        # weights stay VMEM-resident across tiles
    const3 = lambda i: (0, 0, 0)

    in_specs = [
        pl.BlockSpec((tb, sd + ad), batch_map),
        pl.BlockSpec((sd + ad, 2 * H), const2),
        pl.BlockSpec((2, H, H), const3),
        pl.BlockSpec((2 * H, 2), const2),
        pl.BlockSpec((3, 2 * H), const2),
    ]
    out_specs = pl.BlockSpec((tb, 2), batch_map)

    args = (sa, packed["w1"], packed["w25"], packed["w36"], packed["bias"])
    flops = 2 * Bp * ((sd + ad) * 2 * H + 2 * H * H + 2 * H * 2)
    bytes_accessed = sum(int(a.size) * a.dtype.itemsize for a in args) + Bp * 2 * 4

    out = pl.pallas_call(
        _critic_kernel,
        out_shape=jax.ShapeDtypeStruct((Bp, 2), jnp.float32),
        grid=grid,
        in_specs=in_specs,
        out_specs=out_specs,
        compiler_params=pltpu.CompilerParams(
            dimension_semantics=("parallel",)),
        cost_estimate=pl.CostEstimate(
            flops=flops, transcendentals=0, bytes_accessed=bytes_accessed),
    )(*args)
    return out[:B] if Bp != B else out


def init_critic_params(key, state_dim, action_dim):
    """float32 master weights mimicking nn.Linear default init (+-1/sqrt(fan_in)).

    Weights are stored as (in_features, out_features) (transpose of PyTorch)."""
    dims = [
        ("w1", "b1", state_dim + action_dim, HIDDEN),
        ("w2", "b2", HIDDEN, HIDDEN),
        ("w3", "b3", HIDDEN, 1),
        ("w4", "b4", state_dim + action_dim, HIDDEN),
        ("w5", "b5", HIDDEN, HIDDEN),
        ("w6", "b6", HIDDEN, 1),
    ]
    params = {}
    for wname, bname, fan_in, fan_out in dims:
        key, kw, kb = jax.random.split(key, 3)
        bound = 1.0 / jnp.sqrt(jnp.float32(fan_in))
        params[wname] = jax.random.uniform(
            kw, (fan_in, fan_out), jnp.float32, -bound, bound)
        params[bname] = jax.random.uniform(
            kb, (1, fan_out), jnp.float32, -bound, bound)
    return params


def pack_critic_params(params, compute_dtype=jnp.bfloat16):
    """One-time packing of the 12 PyTorch tensors into 4 kernel-friendly arrays."""
    H = HIDDEN
    # layer 1: fuse both heads along the output dim -> (sd+ad, 2H)
    w1 = jnp.concatenate([params["w1"], params["w4"]], axis=1).astype(compute_dtype)
    # layer 2: stack the two heads on a leading axis -> (2, H, H)
    w25 = jnp.stack([params["w2"], params["w5"]], axis=0).astype(compute_dtype)
    # layer 3: single block-structured (2H, 2) weight [[w3, 0], [0, w6]]
    z = jnp.zeros((H, 1), jnp.float32)
    w36 = jnp.concatenate(
        [jnp.concatenate([params["w3"], z], axis=1),
         jnp.concatenate([z, params["w6"]], axis=1)], axis=0).astype(compute_dtype)
    # biases stay float32, packed into one (3, 2H) array
    bias = jnp.zeros((3, 2 * H), jnp.float32)
    bias = bias.at[0, :].set(jnp.concatenate([params["b1"][0], params["b4"][0]]))
    bias = bias.at[1, :].set(jnp.concatenate([params["b2"][0], params["b5"][0]]))
    bias = bias.at[2, 0].set(params["b3"][0, 0])
    bias = bias.at[2, 1].set(params["b6"][0, 0])
    return {"w1": w1, "w25": w25, "w36": w36, "bias": bias}


def critic_forward(state, action, packed, noise_key=None, noise_percent=0.0):
    """Module-contract wrapper: returns (q1, q2), each (B, 1)."""
    q = critic_pallas(state, action, packed)          # fused (B, 2)
    q1, q2 = q[:, 0:1], q[:, 1:2]
    if noise_percent != 0.0:
        # Matches Critic.add_noise: x + noise_percent * mean(x) * N(0,1), per head.
        # TODO(synk): fold into the kernel with pltpu.prng_seed/prng_random_bits
        # if noise_percent != 0 ever becomes a hot path.
        k1, k2 = jax.random.split(noise_key)
        q1 = q1 + noise_percent * jnp.mean(q1) * jax.random.normal(k1, q1.shape, q1.dtype)
        q2 = q2 + noise_percent * jnp.mean(q2) * jax.random.normal(k2, q2.shape, q2.dtype)
    return q1, q2


def _reference_forward(state, action, params, compute_dtype=jnp.float32):
    """Pure-JAX reference. compute_dtype=bfloat16 emulates the kernel's casts."""
    sa = jnp.concatenate([state, action], axis=-1)

    def dot(a, w):
        return jnp.dot(a.astype(compute_dtype), w.astype(compute_dtype),
                       preferred_element_type=jnp.float32)

    def mlp(x, w1, b1, w2, b2, w3, b3):
        h = jnp.maximum(dot(x, w1) + b1, 0.0)
        h = jnp.maximum(dot(h, w2) + b2, 0.0)
        return dot(h, w3) + b3

    q1 = mlp(sa, params["w1"], params["b1"], params["w2"], params["b2"],
             params["w3"], params["b3"])
    q2 = mlp(sa, params["w4"], params["b4"], params["w5"], params["b5"],
             params["w6"], params["b6"])
    return q1, q2


if __name__ == "__main__":
    key = jax.random.PRNGKey(0)
    kparam, kstate, kaction, kstate2, kaction2 = jax.random.split(key, 5)

    batch, state_dim, action_dim = 8, 8, 4
    noise_percent = 0.0  # module default -> add_noise is the identity

    params = init_critic_params(kparam, state_dim, action_dim)
    packed = pack_critic_params(params)

    state = jax.random.normal(kstate, (batch, state_dim), jnp.float32)
    action = jax.random.normal(kaction, (batch, action_dim), jnp.float32)

    q1, q2 = critic_forward(state, action, packed, noise_percent=noise_percent)
    q1 = jax.block_until_ready(q1)
    q2 = jax.block_until_ready(q2)
    assert q1.shape == (batch, 1) and q2.shape == (batch, 1)

    # Tight check against a reference emulating the kernel's bf16 operand casts.
    r1, r2 = _reference_forward(state, action, params, compute_dtype=jnp.bfloat16)
    assert jnp.allclose(q1, r1, atol=3e-3, rtol=3e-3), "q1 mismatch (bf16 ref)"
    assert jnp.allclose(q2, r2, atol=3e-3, rtol=3e-3), "q2 mismatch (bf16 ref)"

    # Loose semantic check against the full-float32 reference (PyTorch math).
    f1, f2 = _reference_forward(state, action, params, compute_dtype=jnp.float32)
    assert jnp.allclose(q1, f1, atol=5e-2, rtol=5e-2), "q1 mismatch (f32 ref)"
    assert jnp.allclose(q2, f2, atol=5e-2, rtol=5e-2), "q2 mismatch (f32 ref)"

    # Exercise the tiled + padded + parallel-grid path (tb=256, grid=2, pad 384->512).
    B2 = 384
    state2 = jax.random.normal(kstate2, (B2, state_dim), jnp.float32)
    action2 = jax.random.normal(kaction2, (B2, action_dim), jnp.float32)
    p1, p2 = critic_forward(state2, action2, packed, noise_percent=0.0)
    p1 = jax.block_until_ready(p1)
    p2 = jax.block_until_ready(p2)
    t1, t2 = _reference_forward(state2, action2, params, compute_dtype=jnp.bfloat16)
    assert p1.shape == (B2, 1) and p2.shape == (B2, 1)
    assert jnp.allclose(p1, t1, atol=3e-3, rtol=3e-3), "q1 mismatch (tiled path)"
    assert jnp.allclose(p2, t2, atol=3e-3, rtol=3e-3), "q2 mismatch (tiled path)"

    print("KERNEL_OK")
</pallas_src>

<mosaic_0001>
module attributes {stable_mosaic.version = 11 : i64} {
  func.func @_critic_kernel(%arg0: i32, %arg1: memref<8x12xbf16, #tpu.memory_space<vmem>>, %arg2: memref<12x512xbf16, #tpu.memory_space<vmem>>, %arg3: memref<2x256x256xbf16, #tpu.memory_space<vmem>>, %arg4: memref<512x2xbf16, #tpu.memory_space<vmem>>, %arg5: memref<3x512xf32, #tpu.memory_space<vmem>>, %arg6: memref<8x2xf32, #tpu.memory_space<vmem>>) attributes {dimension_semantics = [#tpu.dimension_semantics<parallel>], iteration_bounds = array<i64: 1>, scalar_prefetch = 0 : i64, scratch_operands = 0 : i64, tpu.core_type = #tpu.core_type<tc>, window_params = [{transform_indices = @transform_0, window_bounds = array<i64: 8, 12>}, {pipeline_mode = #tpu.pipeline_mode<synchronous>, transform_indices = @transform_1, window_bounds = array<i64: 12, 512>}, {pipeline_mode = #tpu.pipeline_mode<synchronous>, transform_indices = @transform_2, window_bounds = array<i64: 2, 256, 256>}, {pipeline_mode = #tpu.pipeline_mode<synchronous>, transform_indices = @transform_3, window_bounds = array<i64: 512, 2>}, {pipeline_mode = #tpu.pipeline_mode<synchronous>, transform_indices = @transform_4, window_bounds = array<i64: 3, 512>}, {transform_indices = @transform_5, window_bounds = array<i64: 8, 2>}]} {
    %c0 = arith.constant 0 : index
    %c0_0 = arith.constant 0 : index
    %0 = vector.load %arg5[%c0, %c0_0] : memref<3x512xf32, #tpu.memory_space<vmem>>, vector<3x512xf32>
    %1 = vector.extract_strided_slice %0 {offsets = [0, 0], sizes = [1, 512], strides = [1, 1]} : vector<3x512xf32> to vector<1x512xf32>
    %2 = vector.extract_strided_slice %0 {offsets = [1, 0], sizes = [1, 256], strides = [1, 1]} : vector<3x512xf32> to vector<1x256xf32>
    %3 = vector.extract_strided_slice %0 {offsets = [1, 256], sizes = [1, 256], strides = [1, 1]} : vector<3x512xf32> to vector<1x256xf32>
    %4 = vector.extract_strided_slice %0 {offsets = [2, 0], sizes = [1, 2], strides = [1, 1]} : vector<3x512xf32> to vector<1x2xf32>
    %c0_1 = arith.constant 0 : index
    %c0_2 = arith.constant 0 : index
    %5 = vector.load %arg1[%c0_1, %c0_2] : memref<8x12xbf16, #tpu.memory_space<vmem>>, vector<8x12xbf16>
    %c0_3 = arith.constant 0 : index
    %c0_4 = arith.constant 0 : index
    %6 = vector.load %arg2[%c0_3, %c0_4] : memref<12x512xbf16, #tpu.memory_space<vmem>>, vector<12x512xbf16>
    %cst = arith.constant dense<0.000000e+00> : vector<8x512xf32>
    %7 = tpu.matmul %5, %6, %cst {dimension_numbers = #tpu.dot_dimension_numbers<[1], [0], [0], [1], [0, 0, 1, 1], [], []>} : vector<8x12xbf16>, vector<12x512xbf16>, vector<8x512xf32> -> vector<8x512xf32>
    %8 = vector.broadcast %1 : vector<1x512xf32> to vector<8x512xf32>
    %9 = arith.addf %7, %8 : vector<8x512xf32>
    %cst_5 = arith.constant 0.000000e+00 : f32
    %10 = vector.broadcast %cst_5 : f32 to vector<8x512xf32>
    %11 = arith.maximumf %9, %10 : vector<8x512xf32>
    %12 = vector.extract_strided_slice %11 {offsets = [0, 0], sizes = [8, 256], strides = [1, 1]} : vector<8x512xf32> to vector<8x256xf32>
    %13 = arith.truncf %12 : vector<8x256xf32> to vector<8x256xbf16>
    %14 = vector.extract_strided_slice %11 {offsets = [0, 256], sizes = [8, 256], strides = [1, 1]} : vector<8x512xf32> to vector<8x256xf32>
    %15 = arith.truncf %14 : vector<8x256xf32> to vector<8x256xbf16>
    %c0_6 = arith.constant 0 : index
    %c0_7 = arith.constant 0 : index
    %c0_8 = arith.constant 0 : index
    %16 = vector.load %arg3[%c0_6, %c0_7, %c0_8] : memref<2x256x256xbf16, #tpu.memory_space<vmem>>, vector<1x256x256xbf16>
    %17 = vector.shape_cast %16 : vector<1x256x256xbf16> to vector<256x256xbf16>
    %cst_9 = arith.constant dense<0.000000e+00> : vector<8x256xf32>
    %18 = tpu.matmul %13, %17, %cst_9 {dimension_numbers = #tpu.dot_dimension_numbers<[1], [0], [0], [1], [0, 0, 1, 1], [], []>} : vector<8x256xbf16>, vector<256x256xbf16>, vector<8x256xf32> -> vector<8x256xf32>
    %19 = vector.broadcast %2 : vector<1x256xf32> to vector<8x256xf32>
    %20 = arith.addf %18, %19 : vector<8x256xf32>
    %cst_10 = arith.constant 0.000000e+00 : f32
    %21 = vector.broadcast %cst_10 : f32 to vector<8x256xf32>
    %22 = arith.maximumf %20, %21 : vector<8x256xf32>
    %c1 = arith.constant 1 : index
    %c0_11 = arith.constant 0 : index
    %c0_12 = arith.constant 0 : index
    %23 = vector.load %arg3[%c1, %c0_11, %c0_12] : memref<2x256x256xbf16, #tpu.memory_space<vmem>>, vector<1x256x256xbf16>
    %24 = vector.shape_cast %23 : vector<1x256x256xbf16> to vector<256x256xbf16>
    %cst_13 = arith.constant dense<0.000000e+00> : vector<8x256xf32>
    %25 = tpu.matmul %15, %24, %cst_13 {dimension_numbers = #tpu.dot_dimension_numbers<[1], [0], [0], [1], [0, 0, 1, 1], [], []>} : vector<8x256xbf16>, vector<256x256xbf16>, vector<8x256xf32> -> vector<8x256xf32>
    %26 = vector.broadcast %3 : vector<1x256xf32> to vector<8x256xf32>
    %27 = arith.addf %25, %26 : vector<8x256xf32>
    %cst_14 = arith.constant 0.000000e+00 : f32
    %28 = vector.broadcast %cst_14 : f32 to vector<8x256xf32>
    %29 = arith.maximumf %27, %28 : vector<8x256xf32>
    %30 = arith.truncf %22 : vector<8x256xf32> to vector<8x256xbf16>
    %31 = arith.truncf %29 : vector<8x256xf32> to vector<8x256xbf16>
    %32 = tpu.concatenate %30, %31 in 1 : vector<8x256xbf16>, vector<8x256xbf16> -> vector<8x512xbf16>
    %c0_15 = arith.constant 0 : index
    %c0_16 = arith.constant 0 : index
    %33 = vector.load %arg4[%c0_15, %c0_16] : memref<512x2xbf16, #tpu.memory_space<vmem>>, vector<512x2xbf16>
    %cst_17 = arith.constant dense<0.000000e+00> : vector<8x2xf32>
    %34 = tpu.matmul %32, %33, %cst_17 {dimension_numbers = #tpu.dot_dimension_numbers<[1], [0], [0], [1], [0, 0, 1, 1], [], []>} : vector<8x512xbf16>, vector<512x2xbf16>, vector<8x2xf32> -> vector<8x2xf32>
    %35 = vector.broadcast %4 : vector<1x2xf32> to vector<8x2xf32>
    %36 = arith.addf %34, %35 : vector<8x2xf32>
    %c0_18 = arith.constant 0 : index
    %c0_19 = arith.constant 0 : index
    %37 = vector.load %arg6[%c0_18, %c0_19] : memref<8x2xf32, #tpu.memory_space<vmem>>, vector<8x2xf32>
    tpu.vector_store %arg6[%c0_18, %c0_19], %36 {strides = array<i32>} : memref<8x2xf32, #tpu.memory_space<vmem>>, vector<8x2xf32>,
    return
  }
  func.func @transform_0(%arg0: i32) -> (i32, i32) {
    %c0_i32 = arith.constant 0 : i32
    %c0_i32_0 = arith.constant 0 : i32
    return %arg0, %c0_i32 : i32, i32
  }
  func.func @transform_1(%arg0: i32) -> (i32, i32) {
    %c0_i32 = arith.constant 0 : i32
    %c0_i32_0 = arith.constant 0 : i32
    %c0_i32_1 = arith.constant 0 : i32
    return %c0_i32, %c0_i32_0 : i32, i32
  }
  func.func @transform_2(%arg0: i32) -> (i32, i32, i32) {
    %c0_i32 = arith.constant 0 : i32
    %c0_i32_0 = arith.constant 0 : i32
    %c0_i32_1 = arith.constant 0 : i32
    %c0_i32_2 = arith.constant 0 : i32
    return %c0_i32, %c0_i32_0, %c0_i32_1 : i32, i32, i32
  }
  func.func @transform_3(%arg0: i32) -> (i32, i32) {
    %c0_i32 = arith.constant 0 : i32
    %c0_i32_0 = arith.constant 0 : i32
    %c0_i32_1 = arith.constant 0 : i32
    return %c0_i32, %c0_i32_0 : i32, i32
  }
  func.func @transform_4(%arg0: i32) -> (i32, i32) {
    %c0_i32 = arith.constant 0 : i32
    %c0_i32_0 = arith.constant 0 : i32
    %c0_i32_1 = arith.constant 0 : i32
    return %c0_i32, %c0_i32_0 : i32, i32
  }
  func.func @transform_5(%arg0: i32) -> (i32, i32) {
    %c0_i32 = arith.constant 0 : i32
    %c0_i32_0 = arith.constant 0 : i32
    return %arg0, %c0_i32 : i32, i32
  }
}

</mosaic_0001>

<llo_original>
// kernel: tpu_custom_call.1
$region0: #{tpu_custom_call.1}
  #allocation0 [shape = 'u32[]', space=smem, size = 0x4, offset = 0x4, fixed_abs, tag = 'smem constant byte address 0x4 - core index']
  #allocation1 [shape = 'u32[144,128]{1,0:T(1,128)}', space=vmem, size = 0x12000, scoped, tag = 'internal scratch']
  %s0 = inlined_call_operand.vmem [shape: bf16[8,12], index: 0, kind: input, shape index: {}]
  %s1 = inlined_call_operand.vmem [shape: bf16[12,512], index: 1, kind: input, shape index: {}]
  %s2 = inlined_call_operand.hbm [shape: bf16[2,256,256], index: 2, kind: input, shape index: {}]
  %s3 = inlined_call_operand.vmem [shape: bf16[512,2], index: 3, kind: input, shape index: {}]
  %s4 = inlined_call_operand.vmem [shape: f32[3,512], index: 4, kind: input, shape index: {}]
  %s5 = inlined_call_operand.vmem [shape: f32[8,2], index: 5, kind: output, shape index: {}]
  %s6 = sld [smem:[#allocation0]]
  $region34: #{tpu_custom_call.1} parent=0
    _
  %s8 = ssub.s32 1, %s6
  %s9 = scalar_select 0, %s8, %s6
  $region1: #{tpu_custom_call.1} parent=0
    #allocation2 [shape = 'u8[262144]{0}', space=vmem, size = 0x40000, scoped, tag = 'input window, operand 2, single buffered']
    #allocation3 [shape = 's32[1]{0}', space=sflag, size = 0x4, scoped, tag = 'scoped memory for tpu_custom_call.1']
    %10 = vsyncpa [#allocation3], 0
    // Predicated region
    $region2: #{tpu_custom_call.1} parent=1 // pred_check
      _
    $region3: #{tpu_custom_call.1} parent=1 // pred_check_branch
      %12 = sbr.rel (0) target = $region5
    $region4: #{tpu_custom_call.1} parent=1 // pred_region
      _
    $region5: #{tpu_custom_call.1} parent=1 // pred_fallthru
      _
    // Predicated region
    $region6: #{tpu_custom_call.1} parent=1 // pred_check
      _
    $region7: #{tpu_custom_call.1} parent=1 // pred_check_branch
      %14 = sbr.rel (0) target = $region9
    $region8: #{tpu_custom_call.1} parent=1 // pred_region
      _
    $region9: #{tpu_custom_call.1} parent=1 // pred_fallthru
      _
    // Predicated region
    $region10: #{tpu_custom_call.1} parent=1 // pred_check
      _
    $region11: #{tpu_custom_call.1} parent=1 // pred_check_branch
      %16 = sbr.rel (0) target = $region13
    $region12: #{tpu_custom_call.1} parent=1 // pred_region
      %s18 = ssub.s32 8192, 8192
      %19 = vsyncadd [#allocation3], %s18
      %s20 = sshll.u32 [#allocation2], 4
      %s21 = int_to_ptr.vmem [resolvable:$true] %s20
      %26 = dma.hbm_to_vmem [thread:$0]  %s2, 8192, %s21, [#allocation3], 128, 128, 8
    $region13: #{tpu_custom_call.1} parent=1 // pred_fallthru
      _
    // Predicated region
    $region14: #{tpu_custom_call.1} parent=1 // pred_check
      _
    $region15: #{tpu_custom_call.1} parent=1 // pred_check_branch
      %28 = sbr.rel (0) target = $region17
    $region16: #{tpu_custom_call.1} parent=1 // pred_region
      _
    $region17: #{tpu_custom_call.1} parent=1 // pred_fallthru
      _
    // Predicated region
    $region18: #{tpu_custom_call.1} parent=1 // pred_check
      _
    $region19: #{tpu_custom_call.1} parent=1 // pred_check_branch
      %30 = sbr.rel (0) target = $region21
    $region20: #{tpu_custom_call.1} parent=1 // pred_region
      _
    $region21: #{tpu_custom_call.1} parent=1 // pred_fallthru
      _
    // Predicated region
    $region22: #{tpu_custom_call.1} parent=1 // pred_check
      _
    $region23: #{tpu_custom_call.1} parent=1 // pred_check_branch
      %32 = sbr.rel (0) target = $region25
    $region24: #{tpu_custom_call.1} parent=1 // pred_region
      %33 = dma.done [#allocation3], 8192
    $region25: #{tpu_custom_call.1} parent=1 // pred_fallthru
      _
    %v35 = vld [vmem:[%s4] sm:$0x77]
    %v36 = vld [vmem:[%s4 + $0x8] sm:$0x77]
    %v37 = vld [vmem:[%s0] sm:$0xf]
    %v38 = vld [vmem:[%s1] sm:$0xff]
    %v39 = vld [vmem:[%s1 + $0x8] sm:$0xff]
    %v40 = vld [vmem:[%s1 + $0x10] sm:$0x33]
    %v41 = vld [vmem:[%s1 + $0x18] sm:$0x33]
    %v44 = vlaneseq
    %v45 = vshrl.u32 %v44, 7
    %v46 = vsub.s32 0, %v45
    %v47 = vrot.slane %v35, %v46
    %v48 = vlaneseq
    %v49 = vshrl.u32 %v48, 7
    %v50 = vsub.s32 4, %v49
    %v51 = vrot.slane %v35, %v50
    %v52 = vlaneseq
    %v53 = vshrl.u32 %v52, 7
    %v54 = vsub.s32 0, %v53
    %v55 = vrot.slane %v36, %v54
    %v56 = vlaneseq
    %v57 = vshrl.u32 %v56, 7
    %v58 = vsub.s32 4, %v57
    %v59 = vrot.slane %v36, %v58
    %v64 = vlaneseq
    %v65 = vshrl.u32 %v64, 7
    %v66 = vsub.s32 0, %v65
    %v67 = vrot.slane %v47, %v66
    %v68 = vlaneseq
    %v69 = vshrl.u32 %v68, 7
    %v70 = vsub.s32 0, %v69
    %v71 = vrot.slane %v51, %v70
    %v72 = vlaneseq
    %v73 = vshrl.u32 %v72, 7
    %v74 = vsub.s32 0, %v73
    %v75 = vrot.slane %v55, %v74
    %v76 = vlaneseq
    %v77 = vshrl.u32 %v76, 7
    %v78 = vsub.s32 0, %v77
    %v79 = vrot.slane %v59, %v78
    %v84 = vunpack.c.l.b16 %v38
    %v85 = vunpack.c.h.b16 %v38
    %v86 = vunpack.c.l.b16 %v39
    %v87 = vunpack.c.h.b16 %v39
    %v88 = vunpack.c.l.b16 %v40
    %v89 = vunpack.c.h.b16 %v40
    %v90 = vunpack.c.l.b16 %v41
    %v91 = vunpack.c.h.b16 %v41
    %v92 = vpack.c.b16 %v88, %v84
    %v93 = vpack.c.b16 %v89, %v85
    %v94 = vpack.c.b16 %v90, %v86
    %v95 = vpack.c.b16 %v91, %v87
    %vm96 = vcmask 97280
    %v98 = vsel %vm96, %v37, 0
    %vm100 = vcmask 1045504
    %v102 = vsel %vm100, %v92, 0
    %v105 = vsel %vm100, %v93, 0
    %v108 = vsel %vm100, %v94, 0
    %v111 = vsel %vm100, %v95, 0
    %113 = vmatprep.subr.bf16.mxu0 0
    %114 = vmatpush1.bf16.msra.mxu0 0
    %115 = vmatprep.subr.bf16.mxu0 0
    %116 = vmatpush1.bf16.msra.mxu0 0
    %117 = vmatprep.subr.bf16.mxu0 0
    %118 = vmatpush1.bf16.msra.mxu0 0
    %119 = vmatprep.subr.bf16.mxu0 0
    %120 = vmatpush1.bf16.msra.mxu0 0
    %121 = vmatprep.subr.bf16.mxu0 0
    %122 = vmatpush1.bf16.msra.mxu0 0
    %123 = vmatprep.subr.bf16.mxu0 0
    %124 = vmatpush1.bf16.msra.mxu0 0
    %125 = vmatprep.subr.bf16.mxu0 0
    %126 = vmatpush1.bf16.msra.mxu0 0
    %127 = vmatprep.subr.bf16.mxu0 %v105
    %128 = vmatpush1.bf16.msra.mxu0 %v102
    %129 = vmatprep.subr.bf16.mxu0 0
    %130 = vmatpush2.bf16.msra.mxu0 0
    %131 = vmatprep.subr.bf16.mxu0 0
    %132 = vmatpush2.bf16.msra.mxu0 0
    %133 = vmatprep.subr.bf16.mxu0 0
    %134 = vmatpush2.bf16.msra.mxu0 0
    %135 = vmatprep.subr.bf16.mxu0 0
    %136 = vmatpush2.bf16.msra.mxu0 0
    %137 = vmatprep.subr.bf16.mxu0 0
    %138 = vmatpush2.bf16.msra.mxu0 0
    %139 = vmatprep.subr.bf16.mxu0 0
    %140 = vmatpush2.bf16.msra.mxu0 0
    %141 = vmatprep.subr.bf16.mxu0 0
    %142 = vmatpush2.bf16.msra.mxu0 0
    %143 = vmatprep.subr.bf16.mxu0 0
    %144 = vmatpush2.bf16.msra.mxu0 0
    %145 = vmatprep.mubr.bf16.mxu0 0
    %146 = vmatmul.mubr.bf16.gmra.mxu0 %v98
    %v147 = vpop.f32.mrf.mxu0
    %v148 = vadd.f32 %v67, %v147
    %v149 = vpop.f32.mrf.mxu0
    %v150 = vadd.f32 %v71, %v149
    %v151 = vpop.f32.mrf.mxu0
    %v152 = vpop.f32.mrf.mxu0
    %153 = vdwg.mxu0
    %154 = vmatprep.subr.bf16.mxu0 0
    %155 = vmatpush1.bf16.msra.mxu0 0
    %156 = vmatprep.subr.bf16.mxu0 0
    %157 = vmatpush1.bf16.msra.mxu0 0
    %158 = vmatprep.subr.bf16.mxu0 0
    %159 = vmatpush1.bf16.msra.mxu0 0
    %160 = vmatprep.subr.bf16.mxu0 0
    %161 = vmatpush1.bf16.msra.mxu0 0
    %162 = vmatprep.subr.bf16.mxu0 0
    %163 = vmatpush1.bf16.msra.mxu0 0
    %164 = vmatprep.subr.bf16.mxu0 0
    %165 = vmatpush1.bf16.msra.mxu0 0
    %166 = vmatprep.subr.bf16.mxu0 0
    %167 = vmatpush1.bf16.msra.mxu0 0
    %168 = vmatprep.subr.bf16.mxu0 %v111
    %169 = vmatpush1.bf16.msra.mxu0 %v108
    %170 = vmatprep.subr.bf16.mxu0 0
    %171 = vmatpush2.bf16.msra.mxu0 0
    %172 = vmatprep.subr.bf16.mxu0 0
    %173 = vmatpush2.bf16.msra.mxu0 0
    %174 = vmatprep.subr.bf16.mxu0 0
    %175 = vmatpush2.bf16.msra.mxu0 0
    %176 = vmatprep.subr.bf16.mxu0 0
    %177 = vmatpush2.bf16.msra.mxu0 0
    %178 = vmatprep.subr.bf16.mxu0 0
    %179 = vmatpush2.bf16.msra.mxu0 0
    %180 = vmatprep.subr.bf16.mxu0 0
    %181 = vmatpush2.bf16.msra.mxu0 0
    %182 = vmatprep.subr.bf16.mxu0 0
    %183 = vmatpush2.bf16.msra.mxu0 0
    %184 = vmatprep.subr.bf16.mxu0 0
    %185 = vmatpush2.bf16.msra.mxu0 0
    %186 = vmatprep.mubr.bf16.mxu0 0
    %187 = vmatmul.mubr.bf16.gmra.mxu0 %v98
    %v188 = vpop.f32.mrf.mxu0
    %v189 = vadd.f32 %v75, %v188
    %v190 = vpop.f32.mrf.mxu0
    %v191 = vadd.f32 %v79, %v190
    %v192 = vpop.f32.mrf.mxu0
    %v193 = vpop.f32.mrf.mxu0
    %194 = vdwg.mxu0
    %v195 = vmax.f32 %v148, 0.0
    %v196 = vmax.f32 %v150, 0.0
    %v197 = vmax.f32 %v189, 0.0
    %v198 = vmax.f32 %v191, 0.0
    %v199 = vpack.c.bf16 %v195, %v195
    %v200 = vpack.c.bf16 %v196, %v196
    %v201 = vpack.c.bf16 %v197, %v197
    %v202 = vpack.c.bf16 %v198, %v198
    %v203 = vld [vmem:[#allocation2] sm:$0xff]
    %v204 = vld [vmem:[#allocation2 + $0x8] sm:$0xff]
    %v205 = vld [vmem:[#allocation2 + $0x10] sm:$0xff]
    %v206 = vld [vmem:[#allocation2 + $0x18] sm:$0xff]
    %v207 = vld [vmem:[#allocation2 + $0x20] sm:$0xff]
    %v208 = vld [vmem:[#allocation2 + $0x28] sm:$0xff]
    %v209 = vld [vmem:[#allocation2 + $0x30] sm:$0xff]
    %v210 = vld [vmem:[#allocation2 + $0x38] sm:$0xff]
    %v211 = vld [vmem:[#allocation2 + $0x40] sm:$0xff]
    %v212 = vld [vmem:[#allocation2 + $0x48] sm:$0xff]
    %v213 = vld [vmem:[#allocation2 + $0x50] sm:$0xff]
    %v214 = vld [vmem:[#allocation2 + $0x58] sm:$0xff]
    %v215 = vld [vmem:[#allocation2 + $0x60] sm:$0xff]
    %v216 = vld [vmem:[#allocation2 + $0x68] sm:$0xff]
    %v217 = vld [vmem:[#allocation2 + $0x70] sm:$0xff]
    %v218 = vld [vmem:[#allocation2 + $0x78] sm:$0xff]
    %v219 = vld [vmem:[#allocation2 + $0x80] sm:$0xff]
    %v220 = vld [vmem:[#allocation2 + $0x88] sm:$0xff]
    %v221 = vld [vmem:[#allocation2 + $0x90] sm:$0xff]
    %v222 = vld [vmem:[#allocation2 + $0x98] sm:$0xff]
    %v223 = vld [vmem:[#allocation2 + $0xa0] sm:$0xff]
    %v224 = vld [vmem:[#allocation2 + $0xa8] sm:$0xff]
    %v225 = vld [vmem:[#allocation2 + $0xb0] sm:$0xff]
    %v226 = vld [vmem:[#allocation2 + $0xb8] sm:$0xff]
    %v227 = vld [vmem:[#allocation2 + $0xc0] sm:$0xff]
    %v228 = vld [vmem:[#allocation2 + $0xc8] sm:$0xff]
    %v229 = vld [vmem:[#allocation2 + $0xd0] sm:$0xff]
    %v230 = vld [vmem:[#allocation2 + $0xd8] sm:$0xff]
    %v231 = vld [vmem:[#allocation2 + $0xe0] sm:$0xff]
    %v232 = vld [vmem:[#allocation2 + $0xe8] sm:$0xff]
    %v233 = vld [vmem:[#allocation2 + $0xf0] sm:$0xff]
    %v234 = vld [vmem:[#allocation2 + $0xf8] sm:$0xff]
    %v235 = vlaneseq
    %v236 = vshrl.u32 %v235, 7
    %v237 = vsub.s32 1, %v236
    %v238 = vrot.slane %v35, %v237
    %v239 = vlaneseq
    %v240 = vshrl.u32 %v239, 7
    %v241 = vsub.s32 5, %v240
    %v242 = vrot.slane %v35, %v241
    %v245 = vlaneseq
    %v246 = vshrl.u32 %v245, 7
    %v247 = vsub.s32 1, %v246
    %v248 = vrot.slane %v238, %v247
    %v249 = vlaneseq
    %v250 = vshrl.u32 %v249, 7
    %v251 = vsub.s32 1, %v250
    %v252 = vrot.slane %v242, %v251
    %v285 = vunpack.c.l.b16 %v203
    %v286 = vunpack.c.h.b16 %v203
    %v287 = vunpack.c.l.b16 %v204
    %v288 = vunpack.c.h.b16 %v204
    %v289 = vunpack.c.l.b16 %v205
    %v290 = vunpack.c.h.b16 %v205
    %v291 = vunpack.c.l.b16 %v206
    %v292 = vunpack.c.h.b16 %v206
    %v293 = vunpack.c.l.b16 %v207
    %v294 = vunpack.c.h.b16 %v207
    %v295 = vunpack.c.l.b16 %v208
    %v296 = vunpack.c.h.b16 %v208
    %v297 = vunpack.c.l.b16 %v209
    %v298 = vunpack.c.h.b16 %v209
    %v299 = vunpack.c.l.b16 %v210
    %v300 = vunpack.c.h.b16 %v210
    %v301 = vunpack.c.l.b16 %v211
    %v302 = vunpack.c.h.b16 %v211
    %v303 = vunpack.c.l.b16 %v212
    %v304 = vunpack.c.h.b16 %v212
    %v305 = vunpack.c.l.b16 %v213
    %v306 = vunpack.c.h.b16 %v213
    %v307 = vunpack.c.l.b16 %v214
    %v308 = vunpack.c.h.b16 %v214
    %v309 = vunpack.c.l.b16 %v215
    %v310 = vunpack.c.h.b16 %v215
    %v311 = vunpack.c.l.b16 %v216
    %v312 = vunpack.c.h.b16 %v216
    %v313 = vunpack.c.l.b16 %v217
    %v314 = vunpack.c.h.b16 %v217
    %v315 = vunpack.c.l.b16 %v218
    %v316 = vunpack.c.h.b16 %v218
    %v317 = vunpack.c.l.b16 %v219
    %v318 = vunpack.c.h.b16 %v219
    %v319 = vunpack.c.l.b16 %v220
    %v320 = vunpack.c.h.b16 %v220
    %v321 = vunpack.c.l.b16 %v221
    %v322 = vunpack.c.h.b16 %v221
    %v323 = vunpack.c.l.b16 %v222
    %v324 = vunpack.c.h.b16 %v222
    %v325 = vunpack.c.l.b16 %v223
    %v326 = vunpack.c.h.b16 %v223
    %v327 = vunpack.c.l.b16 %v224
    %v328 = vunpack.c.h.b16 %v224
    %v329 = vunpack.c.l.b16 %v225
    %v330 = vunpack.c.h.b16 %v225
    %v331 = vunpack.c.l.b16 %v226
    %v332 = vunpack.c.h.b16 %v226
    %v333 = vunpack.c.l.b16 %v227
    %v334 = vunpack.c.h.b16 %v227
    %v335 = vunpack.c.l.b16 %v228
    %v336 = vunpack.c.h.b16 %v228
    %v337 = vunpack.c.l.b16 %v229
    %v338 = vunpack.c.h.b16 %v229
    %v339 = vunpack.c.l.b16 %v230
    %v340 = vunpack.c.h.b16 %v230
    %v341 = vunpack.c.l.b16 %v231
    %v342 = vunpack.c.h.b16 %v231
    %v343 = vunpack.c.l.b16 %v232
    %v344 = vunpack.c.h.b16 %v232
    %v345 = vunpack.c.l.b16 %v233
    %v346 = vunpack.c.h.b16 %v233
    %v347 = vunpack.c.l.b16 %v234
    %v348 = vunpack.c.h.b16 %v234
    %v349 = vpack.c.b16 %v287, %v285
    %v350 = vpack.c.b16 %v288, %v286
    %v351 = vpack.c.b16 %v291, %v289
    %v352 = vpack.c.b16 %v292, %v290
    %v353 = vpack.c.b16 %v295, %v293
    %v354 = vpack.c.b16 %v296, %v294
    %v355 = vpack.c.b16 %v299, %v297
    %v356 = vpack.c.b16 %v300, %v298
    %v357 = vpack.c.b16 %v303, %v301
    %v358 = vpack.c.b16 %v304, %v302
    %v359 = vpack.c.b16 %v307, %v305
    %v360 = vpack.c.b16 %v308, %v306
    %v361 = vpack.c.b16 %v311, %v309
    %v362 = vpack.c.b16 %v312, %v310
    %v363 = vpack.c.b16 %v315, %v313
    %v364 = vpack.c.b16 %v316, %v314
    %v365 = vpack.c.b16 %v319, %v317
    %v366 = vpack.c.b16 %v320, %v318
    %v367 = vpack.c.b16 %v323, %v321
    %v368 = vpack.c.b16 %v324, %v322
    %v369 = vpack.c.b16 %v327, %v325
    %v370 = vpack.c.b16 %v328, %v326
    %v371 = vpack.c.b16 %v331, %v329
    %v372 = vpack.c.b16 %v332, %v330
    %v373 = vpack.c.b16 %v335, %v333
    %v374 = vpack.c.b16 %v336, %v334
    %v375 = vpack.c.b16 %v339, %v337
    %v376 = vpack.c.b16 %v340, %v338
    %v377 = vpack.c.b16 %v343, %v341
    %v378 = vpack.c.b16 %v344, %v342
    %v379 = vpack.c.b16 %v347, %v345
    %v380 = vpack.c.b16 %v348, %v346
    %413 = vmatprep.subr.bf16.mxu0 %v364
    %414 = vmatpush1.bf16.msra.mxu0 %v363
    %415 = vmatprep.subr.bf16.mxu0 %v362
    %416 = vmatpush1.bf16.msra.mxu0 %v361
    %417 = vmatprep.subr.bf16.mxu0 %v360
    %418 = vmatpush1.bf16.msra.mxu0 %v359
    %419 = vmatprep.subr.bf16.mxu0 %v358
    %420 = vmatpush1.bf16.msra.mxu0 %v357
    %421 = vmatprep.subr.bf16.mxu0 %v356
    %422 = vmatpush1.bf16.msra.mxu0 %v355
    %423 = vmatprep.subr.bf16.mxu0 %v354
    %424 = vmatpush1.bf16.msra.mxu0 %v353
    %425 = vmatprep.subr.bf16.mxu0 %v352
    %426 = vmatpush1.bf16.msra.mxu0 %v351
    %427 = vmatprep.subr.bf16.mxu0 %v350
    %428 = vmatpush1.bf16.msra.mxu0 %v349
    %429 = vmatprep.subr.bf16.mxu0 %v380
    %430 = vmatpush2.bf16.msra.mxu0 %v379
    %431 = vmatprep.subr.bf16.mxu0 %v378
    %432 = vmatpush2.bf16.msra.mxu0 %v377
    %433 = vmatprep.subr.bf16.mxu0 %v376
    %434 = vmatpush2.bf16.msra.mxu0 %v375
    %435 = vmatprep.subr.bf16.mxu0 %v374
    %436 = vmatpush2.bf16.msra.mxu0 %v373
    %437 = vmatprep.subr.bf16.mxu0 %v372
    %438 = vmatpush2.bf16.msra.mxu0 %v371
    %439 = vmatprep.subr.bf16.mxu0 %v370
    %440 = vmatpush2.bf16.msra.mxu0 %v369
    %441 = vmatprep.subr.bf16.mxu0 %v368
    %442 = vmatpush2.bf16.msra.mxu0 %v367
    %443 = vmatprep.subr.bf16.mxu0 %v366
    %444 = vmatpush2.bf16.msra.mxu0 %v365
    %445 = vmatprep.mubr.bf16.mxu0 %v200
    %446 = vmatmul.mubr.bf16.gmra.mxu0 %v199
    %v447 = vpop.f32.mrf.mxu0
    %v448 = vadd.f32 %v248, %v447
    %v449 = vpop.f32.mrf.mxu0
    %v450 = vadd.f32 %v252, %v449
    %v451 = vpop.f32.mrf.mxu0
    %v452 = vpop.f32.mrf.mxu0
    %453 = vdwg.mxu0
    %v454 = vmax.f32 %v448, 0.0
    %v455 = vmax.f32 %v450, 0.0
    %s456 = scalar_lea.vmem [#allocation2], 256
    %v457 = vld [vmem:[%s456] sm:$0xff]
    %v458 = vld [vmem:[%s456 + $0x8] sm:$0xff]
    %v459 = vld [vmem:[%s456 + $0x10] sm:$0xff]
    %v460 = vld [vmem:[%s456 + $0x18] sm:$0xff]
    %v461 = vld [vmem:[%s456 + $0x20] sm:$0xff]
    %v462 = vld [vmem:[%s456 + $0x28] sm:$0xff]
    %v463 = vld [vmem:[%s456 + $0x30] sm:$0xff]
    %v464 = vld [vmem:[%s456 + $0x38] sm:$0xff]
    %v465 = vld [vmem:[%s456 + $0x40] sm:$0xff]
    %v466 = vld [vmem:[%s456 + $0x48] sm:$0xff]
    %v467 = vld [vmem:[%s456 + $0x50] sm:$0xff]
    %v468 = vld [vmem:[%s456 + $0x58] sm:$0xff]
    %v469 = vld [vmem:[%s456 + $0x60] sm:$0xff]
    %v470 = vld [vmem:[%s456 + $0x68] sm:$0xff]
    %v471 = vld [vmem:[%s456 + $0x70] sm:$0xff]
    %v472 = vld [vmem:[%s456 + $0x78] sm:$0xff]
    %v473 = vld [vmem:[%s456 + $0x80] sm:$0xff]
    %v474 = vld [vmem:[%s456 + $0x88] sm:$0xff]
    %v475 = vld [vmem:[%s456 + $0x90] sm:$0xff]
    %v476 = vld [vmem:[%s456 + $0x98] sm:$0xff]
    %v477 = vld [vmem:[%s456 + $0xa0] sm:$0xff]
    %v478 = vld [vmem:[%s456 + $0xa8] sm:$0xff]
    %v479 = vld [vmem:[%s456 + $0xb0] sm:$0xff]
    %v480 = vld [vmem:[%s456 + $0xb8] sm:$0xff]
    %v481 = vld [vmem:[%s456 + $0xc0] sm:$0xff]
    %v482 = vld [vmem:[%s456 + $0xc8] sm:$0xff]
    %v483 = vld [vmem:[%s456 + $0xd0] sm:$0xff]
    %v484 = vld [vmem:[%s456 + $0xd8] sm:$0xff]
    %v485 = vld [vmem:[%s456 + $0xe0] sm:$0xff]
    %v486 = vld [vmem:[%s456 + $0xe8] sm:$0xff]
    %v487 = vld [vmem:[%s456 + $0xf0] sm:$0xff]
    %v488 = vld [vmem:[%s456 + $0xf8] sm:$0xff]
    %v489 = vlaneseq
    %v490 = vshrl.u32 %v489, 7
    %v491 = vsub.s32 1, %v490
    %v492 = vrot.slane %v36, %v491
    %v493 = vlaneseq
    %v494 = vshrl.u32 %v493, 7
    %v495 = vsub.s32 5, %v494
    %v496 = vrot.slane %v36, %v495
    %v499 = vlaneseq
    %v500 = vshrl.u32 %v499, 7
    %v501 = vsub.s32 1, %v500
    %v502 = vrot.slane %v492, %v501
    %v503 = vlaneseq
    %v504 = vshrl.u32 %v503, 7
    %v505 = vsub.s32 1, %v504
    %v506 = vrot.slane %v496, %v505
    %v539 = vunpack.c.l.b16 %v457
    %v540 = vunpack.c.h.b16 %v457
    %v541 = vunpack.c.l.b16 %v458
    %v542 = vunpack.c.h.b16 %v458
    %v543 = vunpack.c.l.b16 %v459
    %v544 = vunpack.c.h.b16 %v459
    %v545 = vunpack.c.l.b16 %v460
    %v546 = vunpack.c.h.b16 %v460
    %v547 = vunpack.c.l.b16 %v461
    %v548 = vunpack.c.h.b16 %v461
    %v549 = vunpack.c.l.b16 %v462
    %v550 = vunpack.c.h.b16 %v462
    %v551 = vunpack.c.l.b16 %v463
    %v552 = vunpack.c.h.b16 %v463
    %v553 = vunpack.c.l.b16 %v464
    %v554 = vunpack.c.h.b16 %v464
    %v555 = vunpack.c.l.b16 %v465
    %v556 = vunpack.c.h.b16 %v465
    %v557 = vunpack.c.l.b16 %v466
    %v558 = vunpack.c.h.b16 %v466
    %v559 = vunpack.c.l.b16 %v467
    %v560 = vunpack.c.h.b16 %v467
    %v561 = vunpack.c.l.b16 %v468
    %v562 = vunpack.c.h.b16 %v468
    %v563 = vunpack.c.l.b16 %v469
    %v564 = vunpack.c.h.b16 %v469
    %v565 = vunpack.c.l.b16 %v470
    %v566 = vunpack.c.h.b16 %v470
    %v567 = vunpack.c.l.b16 %v471
    %v568 = vunpack.c.h.b16 %v471
    %v569 = vunpack.c.l.b16 %v472
    %v570 = vunpack.c.h.b16 %v472
    %v571 = vunpack.c.l.b16 %v473
    %v572 = vunpack.c.h.b16 %v473
    %v573 = vunpack.c.l.b16 %v474
    %v574 = vunpack.c.h.b16 %v474
    %v575 = vunpack.c.l.b16 %v475
    %v576 = vunpack.c.h.b16 %v475
    %v577 = vunpack.c.l.b16 %v476
    %v578 = vunpack.c.h.b16 %v476
    %v579 = vunpack.c.l.b16 %v477
    %v580 = vunpack.c.h.b16 %v477
    %v581 = vunpack.c.l.b16 %v478
    %v582 = vunpack.c.h.b16 %v478
    %v583 = vunpack.c.l.b16 %v479
    %v584 = vunpack.c.h.b16 %v479
    %v585 = vunpack.c.l.b16 %v480
    %v586 = vunpack.c.h.b16 %v480
    %v587 = vunpack.c.l.b16 %v481
    %v588 = vunpack.c.h.b16 %v481
    %v589 = vunpack.c.l.b16 %v482
    %v590 = vunpack.c.h.b16 %v482
    %v591 = vunpack.c.l.b16 %v483
    %v592 = vunpack.c.h.b16 %v483
    %v593 = vunpack.c.l.b16 %v484
    %v594 = vunpack.c.h.b16 %v484
    %v595 = vunpack.c.l.b16 %v485
    %v596 = vunpack.c.h.b16 %v485
    %v597 = vunpack.c.l.b16 %v486
    %v598 = vunpack.c.h.b16 %v486
    %v599 = vunpack.c.l.b16 %v487
    %v600 = vunpack.c.h.b16 %v487
    %v601 = vunpack.c.l.b16 %v488
    %v602 = vunpack.c.h.b16 %v488
    %v603 = vpack.c.b16 %v541, %v539
    %v604 = vpack.c.b16 %v542, %v540
    %v605 = vpack.c.b16 %v545, %v543
    %v606 = vpack.c.b16 %v546, %v544
    %v607 = vpack.c.b16 %v549, %v547
    %v608 = vpack.c.b16 %v550, %v548
    %v609 = vpack.c.b16 %v553, %v551
    %v610 = vpack.c.b16 %v554, %v552
    %v611 = vpack.c.b16 %v557, %v555
    %v612 = vpack.c.b16 %v558, %v556
    %v613 = vpack.c.b16 %v561, %v559
    %v614 = vpack.c.b16 %v562, %v560
    %v615 = vpack.c.b16 %v565, %v563
    %v616 = vpack.c.b16 %v566, %v564
    %v617 = vpack.c.b16 %v569, %v567
    %v618 = vpack.c.b16 %v570, %v568
    %v619 = vpack.c.b16 %v573, %v571
    %v620 = vpack.c.b16 %v574, %v572
    %v621 = vpack.c.b16 %v577, %v575
    %v622 = vpack.c.b16 %v578, %v576
    %v623 = vpack.c.b16 %v581, %v579
    %v624 = vpack.c.b16 %v582, %v580
    %v625 = vpack.c.b16 %v585, %v583
    %v626 = vpack.c.b16 %v586, %v584
    %v627 = vpack.c.b16 %v589, %v587
    %v628 = vpack.c.b16 %v590, %v588
    %v629 = vpack.c.b16 %v593, %v591
    %v630 = vpack.c.b16 %v594, %v592
    %v631 = vpack.c.b16 %v597, %v595
    %v632 = vpack.c.b16 %v598, %v596
    %v633 = vpack.c.b16 %v601, %v599
    %v634 = vpack.c.b16 %v602, %v600
    %667 = vmatprep.subr.bf16.mxu0 %v618
    %668 = vmatpush1.bf16.msra.mxu0 %v617
    %669 = vmatprep.subr.bf16.mxu0 %v616
    %670 = vmatpush1.bf16.msra.mxu0 %v615
    %671 = vmatprep.subr.bf16.mxu0 %v614
    %672 = vmatpush1.bf16.msra.mxu0 %v613
    %673 = vmatprep.subr.bf16.mxu0 %v612
    %674 = vmatpush1.bf16.msra.mxu0 %v611
    %675 = vmatprep.subr.bf16.mxu0 %v610
    %676 = vmatpush1.bf16.msra.mxu0 %v609
    %677 = vmatprep.subr.bf16.mxu0 %v608
    %678 = vmatpush1.bf16.msra.mxu0 %v607
    %679 = vmatprep.subr.bf16.mxu0 %v606
    %680 = vmatpush1.bf16.msra.mxu0 %v605
    %681 = vmatprep.subr.bf16.mxu0 %v604
    %682 = vmatpush1.bf16.msra.mxu0 %v603
    %683 = vmatprep.subr.bf16.mxu0 %v634
    %684 = vmatpush2.bf16.msra.mxu0 %v633
    %685 = vmatprep.subr.bf16.mxu0 %v632
    %686 = vmatpush2.bf16.msra.mxu0 %v631
    %687 = vmatprep.subr.bf16.mxu0 %v630
    %688 = vmatpush2.bf16.msra.mxu0 %v629
    %689 = vmatprep.subr.bf16.mxu0 %v628
    %690 = vmatpush2.bf16.msra.mxu0 %v627
    %691 = vmatprep.subr.bf16.mxu0 %v626
    %692 = vmatpush2.bf16.msra.mxu0 %v625
    %693 = vmatprep.subr.bf16.mxu0 %v624
    %694 = vmatpush2.bf16.msra.mxu0 %v623
    %695 = vmatprep.subr.bf16.mxu0 %v622
    %696 = vmatpush2.bf16.msra.mxu0 %v621
    %697 = vmatprep.subr.bf16.mxu0 %v620
    %698 = vmatpush2.bf16.msra.mxu0 %v619
    %699 = vmatprep.mubr.bf16.mxu0 %v202
    %700 = vmatmul.mubr.bf16.gmra.mxu0 %v201
    %v701 = vpop.f32.mrf.mxu0
    %v702 = vadd.f32 %v502, %v701
    %v703 = vpop.f32.mrf.mxu0
    %v704 = vadd.f32 %v506, %v703
    %v705 = vpop.f32.mrf.mxu0
    %v706 = vpop.f32.mrf.mxu0
    %707 = vdwg.mxu0
    %v708 = vmax.f32 %v702, 0.0
    %v709 = vmax.f32 %v704, 0.0
    %v710 = vpack.c.bf16 %v454, %v454
    %v711 = vpack.c.bf16 %v455, %v455
    %v712 = vpack.c.bf16 %v708, %v708
    %v713 = vpack.c.bf16 %v709, %v709
    %v714 = vld [vmem:[%s3] sm:$0xf]
    %v715 = vld [vmem:[%s3 + $0x4] sm:$0xf]
    %v716 = vld [vmem:[%s3 + $0x8] sm:$0xf]
    %v717 = vld [vmem:[%s3 + $0xc] sm:$0xf]
    %v718 = vld [vmem:[%s3 + $0x10] sm:$0xf]
    %v719 = vld [vmem:[%s3 + $0x14] sm:$0xf]
    %v720 = vld [vmem:[%s3 + $0x18] sm:$0xf]
    %v721 = vld [vmem:[%s3 + $0x1c] sm:$0xf]
    %v722 = vld [vmem:[%s3 + $0x20] sm:$0xf]
    %v723 = vld [vmem:[%s3 + $0x24] sm:$0xf]
    %v724 = vld [vmem:[%s3 + $0x28] sm:$0xf]
    %v725 = vld [vmem:[%s3 + $0x2c] sm:$0xf]
    %v726 = vld [vmem:[%s3 + $0x30] sm:$0xf]
    %v727 = vld [vmem:[%s3 + $0x34] sm:$0xf]
    %v728 = vld [vmem:[%s3 + $0x38] sm:$0xf]
    %v729 = vld [vmem:[%s3 + $0x3c] sm:$0xf]
    %v730 = vld [vmem:[%s3 + $0x40] sm:$0xf]
    %v731 = vld [vmem:[%s3 + $0x44] sm:$0xf]
    %v732 = vld [vmem:[%s3 + $0x48] sm:$0xf]
    %v733 = vld [vmem:[%s3 + $0x4c] sm:$0xf]
    %v734 = vld [vmem:[%s3 + $0x50] sm:$0xf]
    %v735 = vld [vmem:[%s3 + $0x54] sm:$0xf]
    %v736 = vld [vmem:[%s3 + $0x58] sm:$0xf]
    %v737 = vld [vmem:[%s3 + $0x5c] sm:$0xf]
    %v738 = vld [vmem:[%s3 + $0x60] sm:$0xf]
    %v739 = vld [vmem:[%s3 + $0x64] sm:$0xf]
    %v740 = vld [vmem:[%s3 + $0x68] sm:$0xf]
    %v741 = vld [vmem:[%s3 + $0x6c] sm:$0xf]
    %v742 = vld [vmem:[%s3 + $0x70] sm:$0xf]
    %v743 = vld [vmem:[%s3 + $0x74] sm:$0xf]
    %v744 = vld [vmem:[%s3 + $0x78] sm:$0xf]
    %v745 = vld [vmem:[%s3 + $0x7c] sm:$0xf]
    %v746 = vld [vmem:[%s3 + $0x80] sm:$0xf]
    %v747 = vld [vmem:[%s3 + $0x84] sm:$0xf]
    %v748 = vld [vmem:[%s3 + $0x88] sm:$0xf]
    %v749 = vld [vmem:[%s3 + $0x8c] sm:$0xf]
    %v750 = vld [vmem:[%s3 + $0x90] sm:$0xf]
    %v751 = vld [vmem:[%s3 + $0x94] sm:$0xf]
    %v752 = vld [vmem:[%s3 + $0x98] sm:$0xf]
    %v753 = vld [vmem:[%s3 + $0x9c] sm:$0xf]
    %v754 = vld [vmem:[%s3 + $0xa0] sm:$0xf]
    %v755 = vld [vmem:[%s3 + $0xa4] sm:$0xf]
    %v756 = vld [vmem:[%s3 + $0xa8] sm:$0xf]
    %v757 = vld [vmem:[%s3 + $0xac] sm:$0xf]
    %v758 = vld [vmem:[%s3 + $0xb0] sm:$0xf]
    %v759 = vld [vmem:[%s3 + $0xb4] sm:$0xf]
    %v760 = vld [vmem:[%s3 + $0xb8] sm:$0xf]
    %v761 = vld [vmem:[%s3 + $0xbc] sm:$0xf]
    %v762 = vld [vmem:[%s3 + $0xc0] sm:$0xf]
    %v763 = vld [vmem:[%s3 + $0xc4] sm:$0xf]
    %v764 = vld [vmem:[%s3 + $0xc8] sm:$0xf]
    %v765 = vld [vmem:[%s3 + $0xcc] sm:$0xf]
    %v766 = vld [vmem:[%s3 + $0xd0] sm:$0xf]
    %v767 = vld [vmem:[%s3 + $0xd4] sm:$0xf]
    %v768 = vld [vmem:[%s3 + $0xd8] sm:$0xf]
    %v769 = vld [vmem:[%s3 + $0xdc] sm:$0xf]
    %v770 = vld [vmem:[%s3 + $0xe0] sm:$0xf]
    %v771 = vld [vmem:[%s3 + $0xe4] sm:$0xf]
    %v772 = vld [vmem:[%s3 + $0xe8] sm:$0xf]
    %v773 = vld [vmem:[%s3 + $0xec] sm:$0xf]
    %v774 = vld [vmem:[%s3 + $0xf0] sm:$0xf]
    %v775 = vld [vmem:[%s3 + $0xf4] sm:$0xf]
    %v776 = vld [vmem:[%s3 + $0xf8] sm:$0xf]
    %v777 = vld [vmem:[%s3 + $0xfc] sm:$0xf]
    %v778 = vlaneseq
    %v779 = vshrl.u32 %v778, 7
    %v780 = vsub.s32 2, %v779
    %v781 = vrot.slane %v35, %v780
    %v846 = vunpack.c.l.b16 %v714
    %v847 = vunpack.c.l.b16 %v715
    %v848 = vunpack.c.l.b16 %v716
    %v849 = vunpack.c.l.b16 %v717
    %v850 = vunpack.c.l.b16 %v718
    %v851 = vunpack.c.l.b16 %v719
    %v852 = vunpack.c.l.b16 %v720
    %v853 = vunpack.c.l.b16 %v721
    %v854 = vunpack.c.l.b16 %v722
    %v855 = vunpack.c.l.b16 %v723
    %v856 = vunpack.c.l.b16 %v724
    %v857 = vunpack.c.l.b16 %v725
    %v858 = vunpack.c.l.b16 %v726
    %v859 = vunpack.c.l.b16 %v727
    %v860 = vunpack.c.l.b16 %v728
    %v861 = vunpack.c.l.b16 %v729
    %v862 = vunpack.c.l.b16 %v730
    %v863 = vunpack.c.l.b16 %v731
    %v864 = vunpack.c.l.b16 %v732
    %v865 = vunpack.c.l.b16 %v733
    %v866 = vunpack.c.l.b16 %v734
    %v867 = vunpack.c.l.b16 %v735
    %v868 = vunpack.c.l.b16 %v736
    %v869 = vunpack.c.l.b16 %v737
    %v870 = vunpack.c.l.b16 %v738
    %v871 = vunpack.c.l.b16 %v739
    %v872 = vunpack.c.l.b16 %v740
    %v873 = vunpack.c.l.b16 %v741
    %v874 = vunpack.c.l.b16 %v742
    %v875 = vunpack.c.l.b16 %v743
    %v876 = vunpack.c.l.b16 %v744
    %v877 = vunpack.c.l.b16 %v745
    %v878 = vunpack.c.l.b16 %v746
    %v879 = vunpack.c.l.b16 %v747
    %v880 = vunpack.c.l.b16 %v748
    %v881 = vunpack.c.l.b16 %v749
    %v882 = vunpack.c.l.b16 %v750
    %v883 = vunpack.c.l.b16 %v751
    %v884 = vunpack.c.l.b16 %v752
    %v885 = vunpack.c.l.b16 %v753
    %v886 = vunpack.c.l.b16 %v754
    %v887 = vunpack.c.l.b16 %v755
    %v888 = vunpack.c.l.b16 %v756
    %v889 = vunpack.c.l.b16 %v757
    %v890 = vunpack.c.l.b16 %v758
    %v891 = vunpack.c.l.b16 %v759
    %v892 = vunpack.c.l.b16 %v760
    %v893 = vunpack.c.l.b16 %v761
    %v894 = vunpack.c.l.b16 %v762
    %v895 = vunpack.c.l.b16 %v763
    %v896 = vunpack.c.l.b16 %v764
    %v897 = vunpack.c.l.b16 %v765
    %v898 = vunpack.c.l.b16 %v766
    %v899 = vunpack.c.l.b16 %v767
    %v900 = vunpack.c.l.b16 %v768
    %v901 = vunpack.c.l.b16 %v769
    %v902 = vunpack.c.l.b16 %v770
    %v903 = vunpack.c.l.b16 %v771
    %v904 = vunpack.c.l.b16 %v772
    %v905 = vunpack.c.l.b16 %v773
    %v906 = vunpack.c.l.b16 %v774
    %v907 = vunpack.c.l.b16 %v775
    %v908 = vunpack.c.l.b16 %v776
    %v909 = vunpack.c.l.b16 %v777
    %v910 = vpack.c.b16 %v847, %v846
    %v911 = vpack.c.b16 %v849, %v848
    %v912 = vpack.c.b16 %v851, %v850
    %v913 = vpack.c.b16 %v853, %v852
    %v914 = vpack.c.b16 %v855, %v854
    %v915 = vpack.c.b16 %v857, %v856
    %v916 = vpack.c.b16 %v859, %v858
    %v917 = vpack.c.b16 %v861, %v860
    %v918 = vpack.c.b16 %v863, %v862
    %v919 = vpack.c.b16 %v865, %v864
    %v920 = vpack.c.b16 %v867, %v866
    %v921 = vpack.c.b16 %v869, %v868
    %v922 = vpack.c.b16 %v871, %v870
    %v923 = vpack.c.b16 %v873, %v872
    %v924 = vpack.c.b16 %v875, %v874
    %v925 = vpack.c.b16 %v877, %v876
    %v926 = vpack.c.b16 %v879, %v878
    %v927 = vpack.c.b16 %v881, %v880
    %v928 = vpack.c.b16 %v883, %v882
    %v929 = vpack.c.b16 %v885, %v884
    %v930 = vpack.c.b16 %v887, %v886
    %v931 = vpack.c.b16 %v889, %v888
    %v932 = vpack.c.b16 %v891, %v890
    %v933 = vpack.c.b16 %v893, %v892
    %v934 = vpack.c.b16 %v895, %v894
    %v935 = vpack.c.b16 %v897, %v896
    %v936 = vpack.c.b16 %v899, %v898
    %v937 = vpack.c.b16 %v901, %v900
    %v938 = vpack.c.b16 %v903, %v902
    %v939 = vpack.c.b16 %v905, %v904
    %v940 = vpack.c.b16 %v907, %v906
    %v941 = vpack.c.b16 %v909, %v908
    %974 = vmatprep.subr.bf16.mxu0 0
    %975 = vmatpush1.bf16.msra.mxu0 %v917
    %976 = vmatprep.subr.bf16.mxu0 0
    %977 = vmatpush1.bf16.msra.mxu0 %v916
    %978 = vmatprep.subr.bf16.mxu0 0
    %979 = vmatpush1.bf16.msra.mxu0 %v915
    %980 = vmatprep.subr.bf16.mxu0 0
    %981 = vmatpush1.bf16.msra.mxu0 %v914
    %982 = vmatprep.subr.bf16.mxu0 0
    %983 = vmatpush1.bf16.msra.mxu0 %v913
    %984 = vmatprep.subr.bf16.mxu0 0
    %985 = vmatpush1.bf16.msra.mxu0 %v912
    %986 = vmatprep.subr.bf16.mxu0 0
    %987 = vmatpush1.bf16.msra.mxu0 %v911
    %988 = vmatprep.subr.bf16.mxu0 0
    %989 = vmatpush1.bf16.msra.mxu0 %v910
    %990 = vmatprep.subr.bf16.mxu0 0
    %991 = vmatpush2.bf16.msra.mxu0 %v925
    %992 = vmatprep.subr.bf16.mxu0 0
    %993 = vmatpush2.bf16.msra.mxu0 %v924
    %994 = vmatprep.subr.bf16.mxu0 0
    %995 = vmatpush2.bf16.msra.mxu0 %v923
    %996 = vmatprep.subr.bf16.mxu0 0
    %997 = vmatpush2.bf16.msra.mxu0 %v922
    %998 = vmatprep.subr.bf16.mxu0 0
    %999 = vmatpush2.bf16.msra.mxu0 %v921
    %1000 = vmatprep.subr.bf16.mxu0 0
    %1001 = vmatpush2.bf16.msra.mxu0 %v920
    %1002 = vmatprep.subr.bf16.mxu0 0
    %1003 = vmatpush2.bf16.msra.mxu0 %v919
    %1004 = vmatprep.subr.bf16.mxu0 0
    %1005 = vmatpush2.bf16.msra.mxu0 %v918
    %1006 = vmatprep.mubr.bf16.mxu0 %v711
    %1007 = vmatmul.mubr.bf16.gmra.mxu0 %v710
    %v1008 = vpop.f32.mrf.mxu0
    %v1009 = vadd.f32 %v781, %v1008
    %v1010 = vpop.f32.mrf.mxu0
    %v1011 = vpop.f32.mrf.mxu0
    %v1012 = vpop.f32.mrf.mxu0
    %1013 = vdwg.mxu0
    %1014 = vmatprep.subr.bf16.mxu0 0
    %1015 = vmatpush1.bf16.msra.mxu0 %v933
    %1016 = vmatprep.subr.bf16.mxu0 0
    %1017 = vmatpush1.bf16.msra.mxu0 %v932
    %1018 = vmatprep.subr.bf16.mxu0 0
    %1019 = vmatpush1.bf16.msra.mxu0 %v931
    %1020 = vmatprep.subr.bf16.mxu0 0
    %1021 = vmatpush1.bf16.msra.mxu0 %v930
    %1022 = vmatprep.subr.bf16.mxu0 0
    %1023 = vmatpush1.bf16.msra.mxu0 %v929
    %1024 = vmatprep.subr.bf16.mxu0 0
    %1025 = vmatpush1.bf16.msra.mxu0 %v928
    %1026 = vmatprep.subr.bf16.mxu0 0
    %1027 = vmatpush1.bf16.msra.mxu0 %v927
    %1028 = vmatprep.subr.bf16.mxu0 0
    %1029 = vmatpush1.bf16.msra.mxu0 %v926
    %1030 = vmatprep.subr.bf16.mxu0 0
    %1031 = vmatpush2.bf16.msra.mxu0 %v941
    %1032 = vmatprep.subr.bf16.mxu0 0
    %1033 = vmatpush2.bf16.msra.mxu0 %v940
    %1034 = vmatprep.subr.bf16.mxu0 0
    %1035 = vmatpush2.bf16.msra.mxu0 %v939
    %1036 = vmatprep.subr.bf16.mxu0 0
    %1037 = vmatpush2.bf16.msra.mxu0 %v938
    %1038 = vmatprep.subr.bf16.mxu0 0
    %1039 = vmatpush2.bf16.msra.mxu0 %v937
    %1040 = vmatprep.subr.bf16.mxu0 0
    %1041 = vmatpush2.bf16.msra.mxu0 %v936
    %1042 = vmatprep.subr.bf16.mxu0 0
    %1043 = vmatpush2.bf16.msra.mxu0 %v935
    %1044 = vmatprep.subr.bf16.mxu0 0
    %1045 = vmatpush2.bf16.msra.mxu0 %v934
    %1046 = vmatprep.mubr.bf16.mxu0 %v713
    %1047 = vmatmul.mubr.bf16.gmra.mxu0 %v712
    %v1048 = vpop.f32.mrf.mxu0
    %v1049 = vadd.f32 %v1009, %v1048
    %v1050 = vpop.f32.mrf.mxu0
    %v1051 = vpop.f32.mrf.mxu0
    %v1052 = vpop.f32.mrf.mxu0
    %1053 = vdwg.mxu0
    %vm1054 = vcmask 15360
    %1055 = vst.msk [vmem:[%s5] sm:$0xff] %vm1054, %v1049
    // Predicated region
    $region26: #{tpu_custom_call.1} parent=1 // pred_check
      _
    $region27: #{tpu_custom_call.1} parent=1 // pred_check_branch
      %1057 = sbr.rel (0) target = $region29
    $region28: #{tpu_custom_call.1} parent=1 // pred_region
      _
    $region29: #{tpu_custom_call.1} parent=1 // pred_fallthru
      _
    // Predicated region
    $region30: #{tpu_custom_call.1} parent=1 // pred_check
      _
    $region31: #{tpu_custom_call.1} parent=1 // pred_check_branch
      %1059 = sbr.rel (0) target = $region33
    $region32: #{tpu_custom_call.1} parent=1 // pred_region
      _
    $region33: #{tpu_custom_call.1} parent=1 // pred_fallthru
      _
    %1060 = vsyncpa [#allocation3], 1

</llo_original>
